<compile_context>
chip_gen: v5e
topology: v5e:2x2
jax: 0.10.0
libtpu: 0.0.40
codegen_flags: <defaults>
</compile_context>

<pallas_src>
import functools

import jax
import jax.numpy as jnp
from jax.experimental import pallas as pl
from jax.experimental.pallas import tpu as pltpu

_LANE = 128
_SUBLANE = 8


def _round_up(x, m):
    return ((x + m - 1) // m) * m


# ----------------------------------------------------------------------------
# Kernels.
# ----------------------------------------------------------------------------
def _bandpass_kernel_single_k(x_ref, w_ref, o_ref):
    # Whole K in one step: write the product directly (no accumulator pass).
    o_ref[...] = jnp.dot(
        x_ref[...], w_ref[...], preferred_element_type=jnp.float32
    ).astype(o_ref.dtype)


def _bandpass_kernel_k_tiled(x_ref, w_ref, o_ref, acc_ref):
    k = pl.program_id(2)
    part = jnp.dot(x_ref[...], w_ref[...], preferred_element_type=jnp.float32)

    @pl.when(k == 0)
    def _():
        acc_ref[...] = part           # overwrite: no separate zero-init pass

    @pl.when(k > 0)
    def _():
        acc_ref[...] += part

    @pl.when(k == pl.num_programs(2) - 1)
    def _():
        o_ref[...] = acc_ref[...].astype(o_ref.dtype)


# ----------------------------------------------------------------------------
# Hardware-aware sizing helpers (plain Python, evaluated at trace time).
# ----------------------------------------------------------------------------
def _usable_vmem_bytes():
    cap = 64 << 20  # conservative fallback (v7x per-TensorCore VMEM)
    try:
        cap = int(pltpu.get_tpu_info().vmem_capacity_bytes)
    except Exception:
        pass
    # Leave headroom for Mosaic internal scratch / semaphores:
    # ~8 MiB on 64 MiB parts (v7x), ~16 MiB on 128 MiB parts (v5e/v6e).
    return cap - max(8 << 20, cap // 8)


def _num_tensorcores_per_chip():
    try:
        kind = jax.devices()[0].device_kind.lower()
    except Exception:
        return 1
    # v7x exposes 2 TensorCores per chip; v5e/v6e have 1.
    return 2 if "7" in kind else 1


def _choose_tiles(m, n_pad, usable, num_cores):
    # --- N tile: keep the output lane-dense; split only for very wide W so the
    #     out/accumulator footprint stays small and tm can grow.
    if n_pad <= 2048:
        tn = n_pad
    else:
        tn = _LANE
        d = _LANE
        while d <= 512:
            if n_pad % d == 0:
                tn = d
            d += _LANE
    n_steps = n_pad // tn

    # --- K tile: largest lane-aligned divisor of n_pad whose double-buffered
    #     bf16 W slab fits in ~45% of usable VMEM.
    w_budget = (usable * 45) // 100
    tk = _LANE
    d = _LANE
    while d <= n_pad:
        if n_pad % d == 0 and 2 * d * tn * 2 <= w_budget:
            tk = d
        d += _LANE
    k_steps = n_pad // tk

    # W's block index is constant iff neither K nor N is tiled -> 1 buffer.
    w_buffers = 1 if (k_steps == 1 and n_steps == 1) else 2

    # --- Row tile: remaining VMEM covers double-buffered x (bf16) + out (f32)
    #     and, only when K-tiled, the f32 accumulator scratch.
    rem = usable - w_buffers * tk * tn * 2
    per_row = 2 * tk * 2 + 2 * tn * 4 + (tn * 4 if k_steps > 1 else 0)
    cap_rows = max(_SUBLANE, (rem // per_row) // _SUBLANE * _SUBLANE)
    tm_max = 1024 if (n_steps > 1 or k_steps > 1) else 512
    tm = min(tm_max, cap_rows, _round_up(m, _SUBLANE))

    # Only on 2-TensorCore parts (v7x): force >=2 M grid steps so both cores
    # get work.  On single-core parts the split would only add overhead and
    # (when W is re-streamed) extra W HBM traffic, so skip it there.
    if num_cores >= 2 and m >= 2 * _SUBLANE and pl.cdiv(m, tm) < 2:
        tm = _round_up(pl.cdiv(m, 2), _SUBLANE)
    if tm > _SUBLANE:
        tm = _round_up(tm, 16)  # bf16-friendly sublane packing

    return tm, tn, tk, w_buffers


# ----------------------------------------------------------------------------
# Apply the precomputed bandpass operator with a Pallas MXU matmul.
# ----------------------------------------------------------------------------
def _apply_bandpass_matrix(x2d, w, n_valid):
    """x2d: (M, num_bins) bf16, w: (N_pad, N_pad) bf16 -> (M, num_bins) f32."""
    m, n = x2d.shape
    assert n == n_valid
    n_pad = w.shape[0]

    # Zero column-pad only (needed so padded lanes never feed NaN/Inf garbage
    # into the matmul); rows are left ragged and handled by the grid.
    pad_cols = n_pad - n
    if pad_cols:
        x2d = jnp.pad(x2d, ((0, 0), (0, pad_cols)))

    usable = _usable_vmem_bytes()
    num_cores = _num_tensorcores_per_chip()
    tm, tn, tk, w_buffers = _choose_tiles(m, n_pad, usable, num_cores)

    m_steps = pl.cdiv(m, tm)
    n_steps = n_pad // tn
    k_steps = n_pad // tk

    # VMEM accounting: x + W + out (double buffers) + f32 accumulator (K-tiled).
    vmem_bytes = (
        2 * tm * tk * 2
        + w_buffers * tk * tn * 2
        + 2 * tm * tn * 4
        + (tm * tn * 4 if k_steps > 1 else 0)
    )
    vmem_limit = int(min(max(vmem_bytes + (4 << 20), 32 << 20), usable))

    # W is streamed once if its block index is constant, otherwise once per
    # M step (the revolving buffer only dedupes consecutive identical blocks).
    w_traffic = n_pad * n_pad * 2
    if n_steps * k_steps > 1:
        w_traffic *= m_steps
    cost = pl.CostEstimate(
        flops=2 * m * n_pad * n_pad,
        bytes_accessed=m * n_pad * 2 + m * n_pad * 4 + w_traffic,
        transcendentals=0,
    )

    if k_steps == 1:
        grid = (m_steps, n_steps)
        w_kwargs = {"pipeline_mode": pl.Buffered(1)} if w_buffers == 1 else {}
        in_specs = [
            pl.BlockSpec((tm, tk), lambda i, j: (i, 0)),
            pl.BlockSpec((tk, tn), lambda i, j: (0, j), **w_kwargs),
        ]
        out_specs = pl.BlockSpec((tm, tn), lambda i, j: (i, j))
        scratch_shapes = []
        kernel = _bandpass_kernel_single_k
        semantics = ("parallel", "parallel")
    else:
        grid = (m_steps, n_steps, k_steps)
        in_specs = [
            pl.BlockSpec((tm, tk), lambda i, j, k: (i, k)),
            pl.BlockSpec((tk, tn), lambda i, j, k: (k, j)),
        ]
        out_specs = pl.BlockSpec((tm, tn), lambda i, j, k: (i, j))
        scratch_shapes = [pltpu.VMEM((tm, tn), jnp.float32)]
        kernel = _bandpass_kernel_k_tiled
        semantics = ("parallel", "parallel", "arbitrary")

    out = pl.pallas_call(
        kernel,
        out_shape=jax.ShapeDtypeStruct((m, n_pad), jnp.float32),
        grid_spec=pltpu.PrefetchScalarGridSpec(
            num_scalar_prefetch=0,
            grid=grid,
            in_specs=in_specs,
            out_specs=out_specs,
            scratch_shapes=scratch_shapes,
        ),
        compiler_params=pltpu.CompilerParams(
            dimension_semantics=semantics,
            vmem_limit_bytes=vmem_limit,
        ),
        cost_estimate=cost,
    )(x2d, w)

    if pad_cols:
        out = out[:, :n]
    return out


# ----------------------------------------------------------------------------
# Module-equivalent wrapper.
# ----------------------------------------------------------------------------
class Bandpass:
    def __init__(self, lower, upper, num_bins=1000, sample_hz=250):
        self.num_bins = num_bins
        self.sample_hz = sample_hz
        n_pad = _round_up(num_bins, _LANE)
        self.n_pad = n_pad

        freq = jnp.fft.fftfreq(num_bins, 1.0 / sample_hz)
        # One-sided mask, exactly as in the torch reference.
        mask = ((freq >= lower) & (freq <= upper)).astype(jnp.complex64)
        # Real linear operator: row j = Re(IFFT(mask * FFT(e_j))).
        eye = jnp.eye(num_bins, dtype=jnp.float32)
        w = jnp.real(
            jnp.fft.ifft(mask[None, :] * jnp.fft.fft(eye, axis=-1), axis=-1)
        ).astype(jnp.float32)
        # Zero-pad once to a lane-aligned (n_pad, n_pad) operator and store in
        # bf16 so the MXU runs at its native rate (accumulation stays f32).
        w = jnp.pad(w, ((0, n_pad - num_bins), (0, n_pad - num_bins)))
        self.w = w.astype(jnp.bfloat16)

    @functools.partial(jax.jit, static_argnums=0)
    def __call__(self, x):
        # x: (..., num_bins) real
        orig_shape = x.shape
        x2d = x.reshape(-1, self.num_bins).astype(jnp.bfloat16)
        y2d = _apply_bandpass_matrix(x2d, self.w, self.num_bins)
        return y2d.reshape(orig_shape)


# ----------------------------------------------------------------------------
# Demo / self-check.
# ----------------------------------------------------------------------------
if __name__ == "__main__":
    key = jax.random.PRNGKey(0)

    # Small, lane-aligned shapes: batch=2, channels=4, num_bins=128.
    num_bins = 128
    sample_hz = 250
    lower, upper = 8.0, 30.0  # deterministic "parameters" of the module

    x = jax.random.normal(key, (2, 4, num_bins), dtype=jnp.float32)

    bp = Bandpass(lower, upper, num_bins=num_bins, sample_hz=sample_hz)
    y = bp(x)
    y = jax.block_until_ready(y)

    # Reference: exact forward semantics (FFT -> mask -> IFFT -> real).
    freq = jnp.fft.fftfreq(num_bins, 1.0 / sample_hz)
    mask = ((freq >= lower) & (freq <= upper)).astype(jnp.complex64)
    y_ref = jnp.real(jnp.fft.ifft(mask * jnp.fft.fft(x, axis=-1), axis=-1))

    assert y.shape == x.shape and y.dtype == jnp.float32
    # Tolerance accounts for bf16 MXU operands (f32 accumulation).
    assert jnp.allclose(y, y_ref, atol=2e-2, rtol=2e-2)

    print("KERNEL_OK")
</pallas_src>

<mosaic_0001>
module attributes {stable_mosaic.version = 11 : i64} {
  func.func @_bandpass_kernel_single_k(%arg0: i32, %arg1: i32, %arg2: memref<8x128xbf16, #tpu.memory_space<vmem>>, %arg3: memref<128x128xbf16, #tpu.memory_space<vmem>>, %arg4: memref<8x128xf32, #tpu.memory_space<vmem>>) attributes {dimension_semantics = [#tpu.dimension_semantics<parallel>, #tpu.dimension_semantics<parallel>], iteration_bounds = array<i64: 1, 1>, scalar_prefetch = 0 : i64, scratch_operands = 0 : i64, tpu.core_type = #tpu.core_type<tc>, window_params = [{transform_indices = @transform_0, window_bounds = array<i64: 8, 128>}, {pipeline_mode = #tpu.pipeline_mode<synchronous>, transform_indices = @transform_1, window_bounds = array<i64: 128, 128>}, {transform_indices = @transform_2, window_bounds = array<i64: 8, 128>}]} {
    %c0 = arith.constant 0 : index
    %c0_0 = arith.constant 0 : index
    %0 = vector.load %arg2[%c0, %c0_0] : memref<8x128xbf16, #tpu.memory_space<vmem>>, vector<8x128xbf16>
    %c0_1 = arith.constant 0 : index
    %c0_2 = arith.constant 0 : index
    %1 = vector.load %arg3[%c0_1, %c0_2] : memref<128x128xbf16, #tpu.memory_space<vmem>>, vector<128x128xbf16>
    %cst = arith.constant dense<0.000000e+00> : vector<8x128xf32>
    %2 = tpu.matmul %0, %1, %cst {dimension_numbers = #tpu.dot_dimension_numbers<[1], [0], [0], [1], [0, 0, 1, 1], [], []>} : vector<8x128xbf16>, vector<128x128xbf16>, vector<8x128xf32> -> vector<8x128xf32>
    %c0_3 = arith.constant 0 : index
    %c0_4 = arith.constant 0 : index
    %3 = vector.load %arg4[%c0_3, %c0_4] : memref<8x128xf32, #tpu.memory_space<vmem>>, vector<8x128xf32>
    tpu.vector_store %arg4[%c0_3, %c0_4], %2 {strides = array<i32>} : memref<8x128xf32, #tpu.memory_space<vmem>>, vector<8x128xf32>,
    return
  }
  func.func @transform_0(%arg0: i32, %arg1: i32) -> (i32, i32) {
    %c0_i32 = arith.constant 0 : i32
    %c0_i32_0 = arith.constant 0 : i32
    return %arg0, %c0_i32 : i32, i32
  }
  func.func @transform_1(%arg0: i32, %arg1: i32) -> (i32, i32) {
    %c0_i32 = arith.constant 0 : i32
    %c0_i32_0 = arith.constant 0 : i32
    return %c0_i32, %arg1 : i32, i32
  }
  func.func @transform_2(%arg0: i32, %arg1: i32) -> (i32, i32) {
    %c0_i32 = arith.constant 0 : i32
    return %arg0, %arg1 : i32, i32
  }
}

</mosaic_0001>

<llo_original>
// kernel: a_call__.1
$region0: #{a_call__.1}
  #allocation0 [shape = 'u32[]', space=smem, size = 0x4, offset = 0x4, fixed_abs, tag = 'smem constant byte address 0x4 - core index']
  #allocation1 [shape = 'u32[72,128]{1,0:T(1,128)}', space=vmem, size = 0x9000, scoped, tag = 'internal scratch']
  %s0 = inlined_call_operand.vmem [shape: bf16[8,128], index: 0, kind: input, shape index: {}]
  %s1 = inlined_call_operand.hbm [shape: bf16[128,128], index: 1, kind: input, shape index: {}]
  %s2 = inlined_call_operand.hbm [shape: f32[8,128], index: 2, kind: output, shape index: {}]
  %s3 = sld [smem:[#allocation0]]
  $region22: #{a_call__.1} parent=0
    _
  %s5 = ssub.s32 1, %s3
  %s6 = scalar_select 0, %s5, %s3
  $region1: #{a_call__.1} parent=0
    #allocation2 [shape = 'u8[32768]{0}', space=vmem, size = 0x8000, scoped, tag = 'input window, operand 1, single buffered']
    #allocation3 [shape = 's32[1]{0}', space=sflag, size = 0x4, scoped, tag = 'scoped memory for a_call__.1']
    #allocation4 [shape = 's32[1]{0}', space=sflag, size = 0x4, scoped, tag = 'scoped memory for a_call__.1']
    #allocation5 [shape = 'u8[4096]{0}', space=vmem, size = 0x1000, scoped, tag = 'output window, operand 0, single buffered']
    %7 = vsyncpa [#allocation3], 0
    %8 = vsyncpa [#allocation4], 0
    // Predicated region
    $region2: #{a_call__.1} parent=1 // pred_check
      _
    $region3: #{a_call__.1} parent=1 // pred_check_branch
      %10 = sbr.rel (0) target = $region5
    $region4: #{a_call__.1} parent=1 // pred_region
      _
    $region5: #{a_call__.1} parent=1 // pred_fallthru
      _
    // Predicated region
    $region6: #{a_call__.1} parent=1 // pred_check
      _
    $region7: #{a_call__.1} parent=1 // pred_check_branch
      %12 = sbr.rel (0) target = $region9
    $region8: #{a_call__.1} parent=1 // pred_region
      %14 = vsyncadd [#allocation3], 0
      %s15 = sshll.u32 %s1, 4
      %s16 = int_to_ptr.hbm [resolvable:$true] %s15
      %s17 = sshll.u32 [#allocation2], 4
      %s18 = int_to_ptr.vmem [resolvable:$true] %s17
      %23 = dma.hbm_to_vmem [thread:$0]  %s16, 1024, %s18, [#allocation3], 64, 64, 4
    $region9: #{a_call__.1} parent=1 // pred_fallthru
      _
    // Predicated region
    $region10: #{a_call__.1} parent=1 // pred_check
      _
    $region11: #{a_call__.1} parent=1 // pred_check_branch
      %25 = sbr.rel (0) target = $region13
    $region12: #{a_call__.1} parent=1 // pred_region
      %27 = dma.done [#allocation3], 1024
    $region13: #{a_call__.1} parent=1 // pred_fallthru
      _
    %v28 = vld [vmem:[%s0] sm:$0xf]
    %v29 = vld [vmem:[#allocation2] sm:$0xf]
    %v30 = vld [vmem:[#allocation2 + $0x4] sm:$0xf]
    %v31 = vld [vmem:[#allocation2 + $0x8] sm:$0xf]
    %v32 = vld [vmem:[#allocation2 + $0xc] sm:$0xf]
    %v33 = vld [vmem:[#allocation2 + $0x10] sm:$0xf]
    %v34 = vld [vmem:[#allocation2 + $0x14] sm:$0xf]
    %v35 = vld [vmem:[#allocation2 + $0x18] sm:$0xf]
    %v36 = vld [vmem:[#allocation2 + $0x1c] sm:$0xf]
    %v37 = vld [vmem:[#allocation2 + $0x20] sm:$0xf]
    %v38 = vld [vmem:[#allocation2 + $0x24] sm:$0xf]
    %v39 = vld [vmem:[#allocation2 + $0x28] sm:$0xf]
    %v40 = vld [vmem:[#allocation2 + $0x2c] sm:$0xf]
    %v41 = vld [vmem:[#allocation2 + $0x30] sm:$0xf]
    %v42 = vld [vmem:[#allocation2 + $0x34] sm:$0xf]
    %v43 = vld [vmem:[#allocation2 + $0x38] sm:$0xf]
    %v44 = vld [vmem:[#allocation2 + $0x3c] sm:$0xf]
    %v61 = vunpack.c.l.b16 %v29
    %v62 = vunpack.c.l.b16 %v30
    %v63 = vunpack.c.l.b16 %v31
    %v64 = vunpack.c.l.b16 %v32
    %v65 = vunpack.c.l.b16 %v33
    %v66 = vunpack.c.l.b16 %v34
    %v67 = vunpack.c.l.b16 %v35
    %v68 = vunpack.c.l.b16 %v36
    %v69 = vunpack.c.l.b16 %v37
    %v70 = vunpack.c.l.b16 %v38
    %v71 = vunpack.c.l.b16 %v39
    %v72 = vunpack.c.l.b16 %v40
    %v73 = vunpack.c.l.b16 %v41
    %v74 = vunpack.c.l.b16 %v42
    %v75 = vunpack.c.l.b16 %v43
    %v76 = vunpack.c.l.b16 %v44
    %v77 = vpack.c.b16 %v62, %v61
    %v78 = vpack.c.b16 %v64, %v63
    %v79 = vpack.c.b16 %v66, %v65
    %v80 = vpack.c.b16 %v68, %v67
    %v81 = vpack.c.b16 %v70, %v69
    %v82 = vpack.c.b16 %v72, %v71
    %v83 = vpack.c.b16 %v74, %v73
    %v84 = vpack.c.b16 %v76, %v75
    %93 = vmatpush.bf16.msra.mxu0 %v84
    %94 = vmatpush.bf16.msra.mxu0 %v83
    %95 = vmatpush.bf16.msra.mxu0 %v82
    %96 = vmatpush.bf16.msra.mxu0 %v81
    %97 = vmatpush.bf16.msra.mxu0 %v80
    %98 = vmatpush.bf16.msra.mxu0 %v79
    %99 = vmatpush.bf16.msra.mxu0 %v78
    %100 = vmatpush.bf16.msra.mxu0 %v77
    %101 = vmatmul.bf16.gmra.mxu0 %v28
    %v102 = vpop.f32.mrf.mxu0
    %v103 = vadd.f32 0.0, %v102
    %v104 = vpop.f32.mrf.mxu0
    %105 = vdwg.mxu0
    %106 = vst [vmem:[#allocation5] sm:$0xff] %v103
    // Predicated region
    $region14: #{a_call__.1} parent=1 // pred_check
      _
    $region15: #{a_call__.1} parent=1 // pred_check_branch
      %108 = sbr.rel (0) target = $region17
    $region16: #{a_call__.1} parent=1 // pred_region
      %110 = vsyncadd [#allocation4], 0
      %s112 = sshll.u32 [#allocation5], 4
      %s113 = int_to_ptr.vmem [resolvable:$true] %s112
      %s114 = sshll.u32 %s2, 4
      %s115 = int_to_ptr.hbm [resolvable:$true] %s114
      %117 = dma.vmem_to_hbm [thread:$0]  %s113, 128, %s115, [#allocation4]
    $region17: #{a_call__.1} parent=1 // pred_fallthru
      _
    // Predicated region
    $region18: #{a_call__.1} parent=1 // pred_check
      _
    $region19: #{a_call__.1} parent=1 // pred_check_branch
      %119 = sbr.rel (0) target = $region21
    $region20: #{a_call__.1} parent=1 // pred_region
      %121 = dma.done [#allocation4], 128
    $region21: #{a_call__.1} parent=1 // pred_fallthru
      _
    %122 = vsyncpa [#allocation3], 1
    %123 = vsyncpa [#allocation4], 1

</llo_original>
